<compile_context>
chip_gen: v6e
topology: v6e:2x2x1
jax: 0.10.0
libtpu: 0.0.40
codegen_flags: <defaults>
</compile_context>

<pallas_src>
import functools

import jax
import jax.numpy as jnp
from jax.experimental import pallas as pl
from jax.experimental.pallas import tpu as pltpu

_LANE = 128


def _soft_dice_kernel(x_ref, y_ref, out_ref, inter_acc, denom_acc,
                      *, smooth, total_rows, mask_last):
    k = pl.program_id(1)          # feature-tile index (inner, "arbitrary")
    nk = pl.num_programs(1)
    rows_tile = x_ref.shape[0]    # static; multiple of 8
    groups = rows_tile // 8

    @pl.when(k == 0)
    def _():
        inter_acc[...] = jnp.zeros_like(inter_acc)
        denom_acc[...] = jnp.zeros_like(denom_acc)

    # Cast the native-dtype tile to f32 in VMEM (bf16 / int8 stay narrow in HBM).
    x = x_ref[...].astype(jnp.float32)
    y = y_ref[...].astype(jnp.float32)
    # sigmoid via tanh: a single EUP push instead of exp + reciprocal.
    probs = 0.5 * jnp.tanh(0.5 * x) + 0.5
    py = probs * y            # numerator contribution
    dn = probs + y            # fused denominator contribution

    def accumulate(py_t, dn_t):
        # Tile-local reduction: pure elementwise VPU add-tree into (8,128) accs.
        inter_acc[...] += jnp.sum(py_t.reshape(groups, 8, _LANE), axis=0)
        denom_acc[...] += jnp.sum(dn_t.reshape(groups, 8, _LANE), axis=0)

    if mask_last:
        @pl.when(k != nk - 1)
        def _():
            accumulate(py, dn)

        @pl.when(k == nk - 1)
        def _():
            # Only the last feature tile can hang past the true row count.
            row_ids = jax.lax.broadcasted_iota(jnp.int32, (rows_tile, _LANE), 0)
            valid = (k * rows_tile + row_ids) < total_rows
            accumulate(jnp.where(valid, py, 0.0), jnp.where(valid, dn, 0.0))
    else:
        accumulate(py, dn)

    @pl.when(k == nk - 1)
    def _():
        # Single cross-lane reduction per batch, once per k-sweep.
        inter = jnp.sum(inter_acc[...])
        denom = jnp.sum(denom_acc[...])
        score = 2.0 * (inter + smooth) / (denom + smooth)
        out_ref[...] = jnp.broadcast_to(score, out_ref.shape).astype(out_ref.dtype)


def soft_dice_loss(x, y, smooth=1.0, target_rows=4096):
    """x = logits, y = targets; both (N, C, H, W), any float/int dtype."""
    n = x.shape[0]
    x2 = jnp.reshape(x, (n, -1))
    y2 = jnp.reshape(y, (n, -1))
    f = x2.shape[1]

    # Keep rows a multiple of 8 so the in-kernel (g, 8, 128) reduce is exact.
    blk = 8 * _LANE
    f_pad = int(pl.cdiv(f, blk) * blk)
    if f_pad != f:
        # TODO(synk): sub-1024 feature remainders still take a wrapper pad copy
        # (rare for conv feature maps); a 2D layout + lane mask would remove it.
        pad = f_pad - f
        # 0.5*tanh(0.5*(-30000)) + 0.5 == 0 exactly => padding contributes 0.
        x2 = jnp.pad(x2, ((0, 0), (0, pad)), constant_values=-30000.0)
        y2 = jnp.pad(y2, ((0, 0), (0, pad)), constant_values=0)
    rows = f_pad // _LANE

    x3 = jnp.reshape(x2, (n, rows, _LANE))
    y3 = jnp.reshape(y2, (n, rows, _LANE))

    # Sublane-pack multiples: f32 -> 8 rows, bf16/f16 -> 16, int8/uint8 -> 32.
    def _pack_rows(dt):
        return 8 * max(1, 4 // jnp.dtype(dt).itemsize)
    pack = max(_pack_rows(x3.dtype), _pack_rows(y3.dtype))

    # VMEM budget per row: double-buffered input blocks + ~4 live f32 tile
    # temporaries.  Keep the total well under v7x's 32 MiB scoped default.
    x_item = jnp.dtype(x3.dtype).itemsize
    y_item = jnp.dtype(y3.dtype).itemsize
    per_row_bytes = 2 * _LANE * (x_item + y_item) + 4 * _LANE * 4
    budget_rows = max(pack, int((24 << 20) // per_row_bytes))

    rows_per_tile = min(int(target_rows), budget_rows)
    rows_per_tile = max(pack, (rows_per_tile // pack) * pack)
    if rows <= rows_per_tile:
        rows_per_tile = rows          # single k step; rows is a multiple of 8
    nk = int(pl.cdiv(rows, rows_per_tile))
    mask_last = (rows % rows_per_tile) != 0

    vmem_limit = int(min(max(per_row_bytes * rows_per_tile + (4 << 20), 8 << 20),
                         28 << 20))

    kernel = functools.partial(_soft_dice_kernel, smooth=float(smooth),
                               total_rows=rows, mask_last=mask_last)

    # TODO(synk): add pipeline_mode=pl.Buffered(3) on the input BlockSpecs if a
    # profile shows exposed DMA with the enlarged tiles.
    scores = pl.pallas_call(
        kernel,
        out_shape=jax.ShapeDtypeStruct((n, 8, _LANE), jnp.float32),
        grid_spec=pltpu.PrefetchScalarGridSpec(
            num_scalar_prefetch=0,
            grid=(n, nk),
            in_specs=[
                pl.BlockSpec((None, rows_per_tile, _LANE), lambda b, k: (b, k, 0)),
                pl.BlockSpec((None, rows_per_tile, _LANE), lambda b, k: (b, k, 0)),
            ],
            out_specs=pl.BlockSpec((None, 8, _LANE), lambda b, k: (b, 0, 0)),
            scratch_shapes=[
                pltpu.VMEM((8, _LANE), jnp.float32),   # sum(p*y) partials
                pltpu.VMEM((8, _LANE), jnp.float32),   # sum(p) + sum(y) partials
            ],
        ),
        compiler_params=pltpu.CompilerParams(
            dimension_semantics=("parallel", "arbitrary"),
            vmem_limit_bytes=vmem_limit),
    )(x3, y3)

    per_batch = scores[:, 0, 0]
    return 1.0 - jnp.sum(per_batch) / n


def _reference(x, y, smooth=1.0):
    n = x.shape[0]
    m1 = jax.nn.sigmoid(jnp.reshape(x, (n, -1)).astype(jnp.float32))
    m2 = jnp.reshape(y, (n, -1)).astype(jnp.float32)
    inter = jnp.sum(m1 * m2, axis=1)
    score = 2.0 * (inter + smooth) / (jnp.sum(m1, 1) + jnp.sum(m2, 1) + smooth)
    return 1.0 - jnp.sum(score) / n


if __name__ == "__main__":
    key = jax.random.PRNGKey(0)
    kx1, ky1, kx2, ky2 = jax.random.split(key, 4)

    # UnetModel(in_channels=3, num_classes=1) logits: (N, 1, H, W).
    # Logits stream as bf16, targets as int8 (smallest native dtype).
    x1 = jax.random.normal(kx1, (2, 1, 64, 64), jnp.float32).astype(jnp.bfloat16)
    y1 = (jax.random.uniform(ky1, (2, 1, 64, 64)) > 0.5).astype(jnp.int8)

    loss1 = jax.block_until_ready(soft_dice_loss(x1, y1, smooth=1.0))
    ref1 = jax.block_until_ready(_reference(x1, y1, smooth=1.0))
    assert jnp.allclose(loss1, ref1, atol=5e-5, rtol=5e-5), (loss1, ref1)

    # Second shape exercises multi-step reduction + in-kernel last-tile masking
    # (rows % rows_per_tile != 0), with no full-tensor pad for divisibility.
    x2 = jax.random.normal(kx2, (2, 1, 80, 80), jnp.float32).astype(jnp.bfloat16)
    y2 = (jax.random.uniform(ky2, (2, 1, 80, 80)) > 0.5).astype(jnp.int8)

    loss2 = jax.block_until_ready(soft_dice_loss(x2, y2, smooth=1.0, target_rows=32))
    ref2 = jax.block_until_ready(_reference(x2, y2, smooth=1.0))
    assert jnp.allclose(loss2, ref2, atol=5e-5, rtol=5e-5), (loss2, ref2)

    print("KERNEL_OK")
</pallas_src>

<mosaic_0001>
module attributes {stable_mosaic.version = 11 : i64} {
  func.func @_soft_dice_kernel(%arg0: i32, %arg1: i32, %arg2: memref<1x32x128xbf16, #tpu.memory_space<vmem>>, %arg3: memref<1x32x128xi8, #tpu.memory_space<vmem>>, %arg4: memref<1x8x128xf32, #tpu.memory_space<vmem>>, %arg5: memref<8x128xf32, #tpu.memory_space<vmem>>, %arg6: memref<8x128xf32, #tpu.memory_space<vmem>>) attributes {dimension_semantics = [#tpu.dimension_semantics<parallel>, #tpu.dimension_semantics<arbitrary>], iteration_bounds = array<i64: 2, 1>, scalar_prefetch = 0 : i64, scratch_operands = 2 : i64, tpu.core_type = #tpu.core_type<tc>, window_params = [{transform_indices = @transform_0, window_bounds = array<i64: 1, 32, 128>}, {transform_indices = @transform_1, window_bounds = array<i64: 1, 32, 128>}, {transform_indices = @transform_2, window_bounds = array<i64: 1, 8, 128>}]} {
    %c0_i32 = arith.constant 0 : i32
    %0 = arith.cmpi eq, %arg1, %c0_i32 : i32
    %1 = arith.extui %0 : i1 to i32
    %c0_i32_0 = arith.constant 0 : i32
    %2 = arith.cmpi ne, %1, %c0_i32_0 : i32
    scf.if %2 {
      %cst_20 = arith.constant 0.000000e+00 : f32
      %31 = vector.broadcast %cst_20 : f32 to vector<8x128xf32>
      %c0_21 = arith.constant 0 : index
      %c0_22 = arith.constant 0 : index
      %32 = vector.load %arg5[%c0_21, %c0_22] : memref<8x128xf32, #tpu.memory_space<vmem>>, vector<8x128xf32>
      tpu.vector_store %arg5[%c0_21, %c0_22], %31 {strides = array<i32>} : memref<8x128xf32, #tpu.memory_space<vmem>>, vector<8x128xf32>,
      %cst_23 = arith.constant 0.000000e+00 : f32
      %33 = vector.broadcast %cst_23 : f32 to vector<8x128xf32>
      %c0_24 = arith.constant 0 : index
      %c0_25 = arith.constant 0 : index
      %34 = vector.load %arg6[%c0_24, %c0_25] : memref<8x128xf32, #tpu.memory_space<vmem>>, vector<8x128xf32>
      tpu.vector_store %arg6[%c0_24, %c0_25], %33 {strides = array<i32>} : memref<8x128xf32, #tpu.memory_space<vmem>>, vector<8x128xf32>,
    } else {
    }
    %c0 = arith.constant 0 : index
    %c0_1 = arith.constant 0 : index
    %c0_2 = arith.constant 0 : index
    %3 = vector.load %arg2[%c0, %c0_1, %c0_2] : memref<1x32x128xbf16, #tpu.memory_space<vmem>>, vector<1x32x128xbf16>
    %4 = vector.shape_cast %3 : vector<1x32x128xbf16> to vector<32x128xbf16>
    %5 = arith.extf %4 : vector<32x128xbf16> to vector<32x128xf32>
    %c0_3 = arith.constant 0 : index
    %c0_4 = arith.constant 0 : index
    %c0_5 = arith.constant 0 : index
    %6 = vector.load %arg3[%c0_3, %c0_4, %c0_5] : memref<1x32x128xi8, #tpu.memory_space<vmem>>, vector<1x32x128xi8>
    %7 = vector.shape_cast %6 : vector<1x32x128xi8> to vector<32x128xi8>
    %8 = arith.sitofp %7 : vector<32x128xi8> to vector<32x128xf32>
    %cst = arith.constant 5.000000e-01 : f32
    %9 = vector.broadcast %cst : f32 to vector<32x128xf32>
    %10 = arith.mulf %9, %5 : vector<32x128xf32>
    %11 = math.tanh %10 : vector<32x128xf32>
    %cst_6 = arith.constant 5.000000e-01 : f32
    %12 = vector.broadcast %cst_6 : f32 to vector<32x128xf32>
    %13 = arith.mulf %12, %11 : vector<32x128xf32>
    %cst_7 = arith.constant 5.000000e-01 : f32
    %14 = vector.broadcast %cst_7 : f32 to vector<32x128xf32>
    %15 = arith.addf %13, %14 : vector<32x128xf32>
    %16 = arith.mulf %15, %8 : vector<32x128xf32>
    %17 = arith.addf %15, %8 : vector<32x128xf32>
    %c0_8 = arith.constant 0 : index
    %c0_9 = arith.constant 0 : index
    %18 = vector.load %arg5[%c0_8, %c0_9] : memref<8x128xf32, #tpu.memory_space<vmem>>, vector<8x128xf32>
    %19 = vector.shape_cast %16 : vector<32x128xf32> to vector<4x8x128xf32>
    %cst_10 = arith.constant dense<0.000000e+00> : vector<8x128xf32>
    %20 = vector.multi_reduction <add>, %19, %cst_10 [0] : vector<4x8x128xf32> to vector<8x128xf32>
    %21 = arith.addf %18, %20 : vector<8x128xf32>
    %c0_11 = arith.constant 0 : index
    %c0_12 = arith.constant 0 : index
    %22 = vector.load %arg5[%c0_11, %c0_12] : memref<8x128xf32, #tpu.memory_space<vmem>>, vector<8x128xf32>
    tpu.vector_store %arg5[%c0_11, %c0_12], %21 {strides = array<i32>} : memref<8x128xf32, #tpu.memory_space<vmem>>, vector<8x128xf32>,
    %c0_13 = arith.constant 0 : index
    %c0_14 = arith.constant 0 : index
    %23 = vector.load %arg6[%c0_13, %c0_14] : memref<8x128xf32, #tpu.memory_space<vmem>>, vector<8x128xf32>
    %24 = vector.shape_cast %17 : vector<32x128xf32> to vector<4x8x128xf32>
    %cst_15 = arith.constant dense<0.000000e+00> : vector<8x128xf32>
    %25 = vector.multi_reduction <add>, %24, %cst_15 [0] : vector<4x8x128xf32> to vector<8x128xf32>
    %26 = arith.addf %23, %25 : vector<8x128xf32>
    %c0_16 = arith.constant 0 : index
    %c0_17 = arith.constant 0 : index
    %27 = vector.load %arg6[%c0_16, %c0_17] : memref<8x128xf32, #tpu.memory_space<vmem>>, vector<8x128xf32>
    tpu.vector_store %arg6[%c0_16, %c0_17], %26 {strides = array<i32>} : memref<8x128xf32, #tpu.memory_space<vmem>>, vector<8x128xf32>,
    %c0_i32_18 = arith.constant 0 : i32
    %28 = arith.cmpi eq, %arg1, %c0_i32_18 : i32
    %29 = arith.extui %28 : i1 to i32
    %c0_i32_19 = arith.constant 0 : i32
    %30 = arith.cmpi ne, %29, %c0_i32_19 : i32
    scf.if %30 {
      %c0_20 = arith.constant 0 : index
      %c0_21 = arith.constant 0 : index
      %31 = vector.load %arg5[%c0_20, %c0_21] : memref<8x128xf32, #tpu.memory_space<vmem>>, vector<8x128xf32>
      %32 = vector.shape_cast %31 : vector<8x128xf32> to vector<1x8x128xf32>
      %cst_22 = arith.constant dense<0.000000e+00> : vector<1xf32>
      %33 = vector.multi_reduction <add>, %32, %cst_22 [1, 2] : vector<1x8x128xf32> to vector<1xf32>
      %34 = vector.shape_cast %33 : vector<1xf32> to vector<1x1x1xf32>
      %35 = vector.extract %34[0, 0, 0] : f32 from vector<1x1x1xf32>
      %c0_23 = arith.constant 0 : index
      %c0_24 = arith.constant 0 : index
      %36 = vector.load %arg6[%c0_23, %c0_24] : memref<8x128xf32, #tpu.memory_space<vmem>>, vector<8x128xf32>
      %37 = vector.shape_cast %36 : vector<8x128xf32> to vector<1x8x128xf32>
      %cst_25 = arith.constant dense<0.000000e+00> : vector<1xf32>
      %38 = vector.multi_reduction <add>, %37, %cst_25 [1, 2] : vector<1x8x128xf32> to vector<1xf32>
      %39 = vector.shape_cast %38 : vector<1xf32> to vector<1x1x1xf32>
      %40 = vector.extract %39[0, 0, 0] : f32 from vector<1x1x1xf32>
      %cst_26 = arith.constant 1.000000e+00 : f32
      %41 = arith.addf %35, %cst_26 : f32
      %cst_27 = arith.constant 2.000000e+00 : f32
      %42 = arith.mulf %cst_27, %41 : f32
      %cst_28 = arith.constant 1.000000e+00 : f32
      %43 = arith.addf %40, %cst_28 : f32
      %44 = arith.divf %42, %43 : f32
      %45 = vector.broadcast %44 : f32 to vector<8x128xf32>
      %c0_29 = arith.constant 0 : index
      %c0_30 = arith.constant 0 : index
      %c0_31 = arith.constant 0 : index
      %46 = vector.load %arg4[%c0_29, %c0_30, %c0_31] : memref<1x8x128xf32, #tpu.memory_space<vmem>>, vector<1x8x128xf32>
      %47 = vector.shape_cast %46 : vector<1x8x128xf32> to vector<8x128xf32>
      %48 = vector.shape_cast %45 : vector<8x128xf32> to vector<1x8x128xf32>
      tpu.vector_store %arg4[%c0_29, %c0_30, %c0_31], %48 {strides = array<i32>} : memref<1x8x128xf32, #tpu.memory_space<vmem>>, vector<1x8x128xf32>,
    } else {
    }
    return
  }
  func.func @transform_0(%arg0: i32, %arg1: i32) -> (i32, i32, i32) {
    %c0_i32 = arith.constant 0 : i32
    %c0_i32_0 = arith.constant 0 : i32
    return %arg0, %arg1, %c0_i32 : i32, i32, i32
  }
  func.func @transform_1(%arg0: i32, %arg1: i32) -> (i32, i32, i32) {
    %c0_i32 = arith.constant 0 : i32
    %c0_i32_0 = arith.constant 0 : i32
    return %arg0, %arg1, %c0_i32 : i32, i32, i32
  }
  func.func @transform_2(%arg0: i32, %arg1: i32) -> (i32, i32, i32) {
    %c0_i32 = arith.constant 0 : i32
    %c0_i32_0 = arith.constant 0 : i32
    %c0_i32_1 = arith.constant 0 : i32
    return %arg0, %c0_i32, %c0_i32_0 : i32, i32, i32
  }
}

</mosaic_0001>

<llo_original>
// kernel: tpu_custom_call.1
$region0: #{tpu_custom_call.1}
  #allocation0 [shape = 'u32[]', space=smem, size = 0x4, offset = 0x4, fixed_abs, tag = 'smem constant byte address 0x4 - core index']
  #allocation1 [shape = 'u32[144,128]{1,0:T(1,128)}', space=vmem, size = 0x12000, scoped, tag = 'internal scratch']
  #allocation2 [shape = 'f32[8,128]{1,0:T(8,128)}', space=vmem, size = 0x1000, scoped, tag = 'scratch operand']
  #allocation3 [shape = 'f32[8,128]{1,0:T(8,128)}', space=vmem, size = 0x1000, scoped, tag = 'scratch operand']
  %s0 = inlined_call_operand.hbm [shape: bf16[2,32,128], index: 0, kind: input, shape index: {}]
  %s1 = inlined_call_operand.hbm [shape: s8[2,32,128], index: 1, kind: input, shape index: {}]
  %s2 = inlined_call_operand.hbm [shape: f32[2,8,128], index: 2, kind: output, shape index: {}]
  %s3 = sld [smem:[#allocation0]]
  $region57: #{tpu_custom_call.1} parent=0
    _
  %s5 = ssub.s32 1, %s3
  %s6 = scalar_select 0, %s5, %s3
  $region1: #{tpu_custom_call.1} parent=0
    #allocation4 [shape = 'u8[16384]{0}', space=vmem, size = 0x4000, scoped, tag = 'input window, operand 0']
    #allocation5 [shape = 's32[2]{0}', space=sflag, size = 0x8, scoped, tag = 'scoped memory for tpu_custom_call.1']
    #allocation6 [shape = 's32[2]{0}', space=sflag, size = 0x8, scoped, tag = 'scoped memory for tpu_custom_call.1']
    #allocation7 [shape = 'u8[8192]{0}', space=vmem, size = 0x2000, scoped, tag = 'input window, operand 1']
    #allocation8 [shape = 's32[2]{0}', space=sflag, size = 0x8, scoped, tag = 'scoped memory for tpu_custom_call.1']
    #allocation9 [shape = 'u8[8192]{0}', space=vmem, size = 0x2000, scoped, tag = 'output window, operand 0']
    %7 = vsyncpa [#allocation5], 0
    %s8 = scalar_lea.sflag [#allocation5], 1
    %9 = vsyncpa %s8, 0
    %10 = vsyncpa [#allocation8], 0
    %s11 = scalar_lea.sflag [#allocation8], 1
    %12 = vsyncpa %s11, 0
    %13 = vsyncpa [#allocation6], 0
    %s14 = scalar_lea.sflag [#allocation6], 1
    %15 = vsyncpa %s14, 0
    loop: start=0, step=1, limit=4
    $region2: #{tpu_custom_call.1} parent=1 // loop_pre_header
      _
    $region3: #{tpu_custom_call.1} parent=1 // loop_header
      %s17 = sphi 0, %s21
      %p18 = scmp.ge.s32.totalorder %s17, 4
      %s24 = sphi 0, %s36
      %s25 = sphi 0, %s32
      %s26 = sphi 0, %s24
      %s27 = sphi 0, %s25
      %s28 = sphi 0, %s26
      %s29 = sphi 0, %s27
      %s41 = sphi 0, %s43
      %s44 = sphi 0, %s41
      %s45 = sphi 0, %s44
      %s61 = sphi 0, %s45
      %s69 = sphi 0, %s71
      %s72 = sphi 0, %s69
      %s73 = sphi 0, %s72
      %s89 = sphi 0, %s73
      %s95 = sphi 0, %s97
      %s98 = sphi 0, %s95
      %s99 = sphi 0, %s98
      %s115 = sphi 0, %s99
    $region4: #{tpu_custom_call.1} parent=1 // loop_header_branch
      %20 = sbr.rel (%p18) target = $region8
    $region5: #{tpu_custom_call.1} parent=1 // loop_body
      %s22 = ssub.s32 %s17, 1
      %s23 = ssub.s32 %s17, 2
      %s30 = sadd.s32 1, %s25
      %p31 = scmp.ge.s32.totalorder %s30, 1
      %s32 = scalar_select %p31, 0, %s30
      %s33 = sadd.s32 1, %s24
      %s34 = scalar_select %p31, %s33, %s24
      %p35 = scmp.ge.s32.totalorder %s34, 2
      %s36 = scalar_select %p35, 0, %s34
      %s37 = ssub.s32 %s24, %s36
      %s38 = ssub.s32 %s25, %s32
      %s39 = sor.u32 %s37, %s38
      %p40 = scmp.eq.s32.totalorder %s39, 0
      %s42 = sadd.s32 %s41, 1
      %s43 = scalar_select %p40, %s41, %s42
      %p46 = pneg %p40
      %p47 = scmp.eq.s32.totalorder %s17, 1
      %p48 = por %p46, %p47
      %p49 = scmp.ne.s32.totalorder %s41, %s44
      %p50 = scmp.eq.s32.totalorder %s17, 0
      %p51 = por %p49, %p50
      %p52 = scmp.ne.s32.totalorder %s41, %s44
      %p53 = scmp.eq.s32.totalorder %s22, 1
      %p54 = por %p52, %p53
      %p55 = scmp.ne.s32.totalorder %s44, %s45
      %p56 = scmp.eq.s32.totalorder %s22, 0
      %p57 = por %p55, %p56
      %p58 = scmp.ne.s32.totalorder %s44, %s45
      %p59 = scmp.eq.s32.totalorder %s23, 1
      %p60 = por %p58, %p59
      %p62 = scmp.ne.s32.totalorder %s45, %s61
      %p63 = scmp.eq.s32.totalorder %s23, 0
      %p64 = por %p62, %p63
      %s65 = ssub.s32 %s24, %s36
      %s66 = ssub.s32 %s25, %s32
      %s67 = sor.u32 %s65, %s66
      %p68 = scmp.eq.s32.totalorder %s67, 0
      %s70 = sadd.s32 %s69, 1
      %s71 = scalar_select %p68, %s69, %s70
      %p74 = pneg %p68
      %p75 = scmp.eq.s32.totalorder %s17, 1
      %p76 = por %p74, %p75
      %p77 = scmp.ne.s32.totalorder %s69, %s72
      %p78 = scmp.eq.s32.totalorder %s17, 0
      %p79 = por %p77, %p78
      %p80 = scmp.ne.s32.totalorder %s69, %s72
      %p81 = scmp.eq.s32.totalorder %s22, 1
      %p82 = por %p80, %p81
      %p83 = scmp.ne.s32.totalorder %s72, %s73
      %p84 = scmp.eq.s32.totalorder %s22, 0
      %p85 = por %p83, %p84
      %p86 = scmp.ne.s32.totalorder %s72, %s73
      %p87 = scmp.eq.s32.totalorder %s23, 1
      %p88 = por %p86, %p87
      %p90 = scmp.ne.s32.totalorder %s73, %s89
      %p91 = scmp.eq.s32.totalorder %s23, 0
      %p92 = por %p90, %p91
      %s93 = ssub.s32 %s24, %s36
      %p94 = scmp.eq.s32.totalorder %s93, 0
      %s96 = sadd.s32 %s95, 1
      %s97 = scalar_select %p94, %s95, %s96
      %p100 = pneg %p94
      %p101 = scmp.eq.s32.totalorder %s17, 1
      %p102 = por %p100, %p101
      %p103 = scmp.ne.s32.totalorder %s95, %s98
      %p104 = scmp.eq.s32.totalorder %s17, 0
      %p105 = por %p103, %p104
      %p106 = scmp.ne.s32.totalorder %s95, %s98
      %p107 = scmp.eq.s32.totalorder %s22, 1
      %p108 = por %p106, %p107
      %p109 = scmp.ne.s32.totalorder %s98, %s99
      %p110 = scmp.eq.s32.totalorder %s22, 0
      %p111 = por %p109, %p110
      %p112 = scmp.ne.s32.totalorder %s98, %s99
      %p113 = scmp.eq.s32.totalorder %s23, 1
      %p114 = por %p112, %p113
      %p116 = scmp.ne.s32.totalorder %s99, %s115
      %p117 = scmp.eq.s32.totalorder %s23, 0
      %p118 = por %p116, %p117
      %p119 = scmp.le.s32.totalorder 1, %s17
      %p120 = scmp.lt.s32.totalorder %s17, 3
      %p121 = pnand %p119, %p120
      %p122 = pneg %p121
      // Predicated region
      $region9: #{tpu_custom_call.1} parent=5 // pred_check
        _
      $region10: #{tpu_custom_call.1} parent=5 // pred_check_branch
        %124 = sbr.rel (%p121) target = $region12
      $region11: #{tpu_custom_call.1} parent=5 // pred_region
        %s125 = ssub.s32 %s17, 1
      $region12: #{tpu_custom_call.1} parent=5 // pred_fallthru
        _
      %p126 = scmp.lt.s32.totalorder %s17, 2
      // Predicated region
      $region13: #{tpu_custom_call.1} parent=5 // pred_check
        %p127 = pneg %p126
      $region14: #{tpu_custom_call.1} parent=5 // pred_check_branch
        %129 = sbr.rel (%p127) target = $region16
      $region15: #{tpu_custom_call.1} parent=5 // pred_region
        // Predicated region
        $region17: #{tpu_custom_call.1} parent=15 // pred_check
          %p130 = pneg %p51
        $region18: #{tpu_custom_call.1} parent=15 // pred_check_branch
          %132 = sbr.rel (%p130) target = $region20
        $region19: #{tpu_custom_call.1} parent=15 // pred_region
          %s133 = sand.u32 %s41, 1
          %s134 = scalar_lea.sflag [#allocation5], %s133
          %s135 = sand.u32 %s41, 1
          %s136 = smul.addr %s135, 16
          %s137 = scalar_lea.vmem [#allocation4], %s136
          %s138 = smul.u32 4, %s25
          %s140 = ssub.s32 256, 256
          %141 = vsyncadd %s134, %s140
          %s142 = smul.addr %s24, 4
          %s143 = sadd.s32 %s138, %s142
          %s144 = smul.addr %s143, 64
          %s145 = scalar_lea.hbm %s0, %s144
          %s146 = sshll.u32 %s137, 4
          %s147 = int_to_ptr.vmem [resolvable:$true] %s146
          %152 = dma.hbm_to_vmem [thread:$0]  %s145, 256, %s147, %s134, 64, 64, 4
        $region20: #{tpu_custom_call.1} parent=15 // pred_fallthru
          _
        // Predicated region
        $region21: #{tpu_custom_call.1} parent=15 // pred_check
          %p153 = pneg %p79
        $region22: #{tpu_custom_call.1} parent=15 // pred_check_branch
          %155 = sbr.rel (%p153) target = $region24
        $region23: #{tpu_custom_call.1} parent=15 // pred_region
          %s156 = sand.u32 %s69, 1
          %s157 = scalar_lea.sflag [#allocation8], %s156
          %s158 = sand.u32 %s69, 1
          %s159 = smul.addr %s158, 8
          %s160 = scalar_lea.vmem [#allocation7], %s159
          %s162 = ssub.s32 128, 128
          %163 = vsyncadd %s157, %s162
          %s164 = sadd.s32 %s25, %s24
          %s165 = smul.addr %s164, 128
          %s166 = scalar_lea.hbm %s1, %s165
          %s168 = sshll.u32 %s160, 4
          %s169 = int_to_ptr.vmem [resolvable:$true] %s168
          %171 = dma.hbm_to_vmem [thread:$0]  %s166, 128, %s169, %s157
        $region24: #{tpu_custom_call.1} parent=15 // pred_fallthru
          _
      $region16: #{tpu_custom_call.1} parent=5 // pred_fallthru
        _
      %p172 = scmp.le.s32.totalorder 1, %s17
      %p173 = scmp.lt.s32.totalorder %s17, 3
      %p174 = pnand %p172, %p173
      %p175 = pneg %p174
      // Predicated region
      $region25: #{tpu_custom_call.1} parent=5 // pred_check
        _
      $region26: #{tpu_custom_call.1} parent=5 // pred_check_branch
        %177 = sbr.rel (%p174) target = $region28
      $region27: #{tpu_custom_call.1} parent=5 // pred_region
        %s178 = ssub.s32 %s17, 1
        %s179 = sand.u32 %s44, 1
        %s180 = scalar_lea.sflag [#allocation5], %s179
        %s181 = sand.u32 %s44, 1
        %s182 = smul.addr %s181, 16
        %s183 = scalar_lea.vmem [#allocation4], %s182
        // Predicated region
        $region29: #{tpu_custom_call.1} parent=27 // pred_check
          %p184 = pneg %p57
        $region30: #{tpu_custom_call.1} parent=27 // pred_check_branch
          %186 = sbr.rel (%p184) target = $region32
        $region31: #{tpu_custom_call.1} parent=27 // pred_region
          %187 = dma.done %s180, 256
        $region32: #{tpu_custom_call.1} parent=27 // pred_fallthru
          _
        %s188 = sand.u32 %s72, 1
        %s189 = scalar_lea.sflag [#allocation8], %s188
        %s190 = sand.u32 %s72, 1
        %s191 = smul.addr %s190, 8
        %s192 = scalar_lea.vmem [#allocation7], %s191
        // Predicated region
        $region33: #{tpu_custom_call.1} parent=27 // pred_check
          %p193 = pneg %p85
        $region34: #{tpu_custom_call.1} parent=27 // pred_check_branch
          %195 = sbr.rel (%p193) target = $region36
        $region35: #{tpu_custom_call.1} parent=27 // pred_region
          %196 = dma.done %s189, 128
        $region36: #{tpu_custom_call.1} parent=27 // pred_fallthru
          _
        %s197 = sand.u32 %s44, 1
        %s198 = scalar_lea.sflag [#allocation5], %s197
        %s199 = sand.u32 %s44, 1
        %s200 = smul.addr %s199, 16
        %s201 = scalar_lea.vmem [#allocation4], %s200
        %p202 = pneg %p57
        %p203 = pneg %p54
        %s204 = sand.u32 %s72, 1
        %s205 = scalar_lea.sflag [#allocation8], %s204
        %s206 = sand.u32 %s72, 1
        %s207 = smul.addr %s206, 8
        %s208 = scalar_lea.vmem [#allocation7], %s207
        %p209 = pneg %p85
        %p210 = pneg %p82
        %p211 = pneg %p111
        %p212 = pneg %p108
        %s213 = sand.u32 %s98, 1
        %s214 = scalar_lea.sflag [#allocation6], %s213
        %s215 = sand.u32 %s98, 1
        %s216 = smul.addr %s215, 8
        %s217 = scalar_lea.vmem [#allocation9], %s216
        %s218 = smul.u32 4, %s27
        %p219 = scmp.eq.s32.totalorder %s27, 0
        // Predicated region
        $region37: #{tpu_custom_call.1} parent=27 // pred_check
          %p220 = pneg %p219
        $region38: #{tpu_custom_call.1} parent=27 // pred_check_branch
          %222 = sbr.rel (%p220) target = $region40
        $region39: #{tpu_custom_call.1} parent=27 // pred_region
          %223 = vst [vmem:[#allocation2] sm:$0xff] 0.0
          %224 = vst [vmem:[#allocation3] sm:$0xff] 0.0
        $region40: #{tpu_custom_call.1} parent=27 // pred_fallthru
          _
        %v225 = vld [vmem:[%s183] sm:$0xf]
        %v226 = vld [vmem:[%s183 + $0x4] sm:$0xf]
        %v227 = vld [vmem:[%s183 + $0x8] sm:$0xf]
        %v228 = vld [vmem:[%s183 + $0xc] sm:$0xf]
        %v229 = vunpack.c.l.bf16 %v225
        %v230 = vunpack.c.l.bf16 %v226
        %v231 = vunpack.c.l.bf16 %v227
        %v232 = vunpack.c.l.bf16 %v228
        %v233 = vld [vmem:[%s192] sm:$0xff]
        %v234 = vunpack.c.0.s8 %v233
        %v235 = vunpack.c.1.s8 %v233
        %v236 = vunpack.c.2.s8 %v233
        %v237 = vunpack.c.3.s8 %v233
        %v238 = vcvt.s32.f32 %v234
        %v239 = vcvt.s32.f32 %v235
        %v240 = vcvt.s32.f32 %v236
        %v241 = vcvt.s32.f32 %v237
        %v242 = vmul.f32 %v229, 0.5
        %v243 = vmul.f32 %v230, 0.5
        %v244 = vmul.f32 %v231, 0.5
        %v245 = vmul.f32 %v232, 0.5
        %v246 = vtanh.pop %v242
        %v247 = vtanh.pop %v243
        %v248 = vtanh.pop %v244
        %v249 = vtanh.pop %v245
        %v250 = vmul.f32 %v246, 0.5
        %v251 = vmul.f32 %v247, 0.5
        %v252 = vmul.f32 %v248, 0.5
        %v253 = vmul.f32 %v249, 0.5
        %v254 = vadd.f32 %v250, 0.5
        %v255 = vadd.f32 %v251, 0.5
        %v256 = vadd.f32 %v252, 0.5
        %v257 = vadd.f32 %v253, 0.5
        %v258 = vmul.f32 %v254, %v238
        %v259 = vmul.f32 %v255, %v239
        %v260 = vmul.f32 %v256, %v240
        %v261 = vmul.f32 %v257, %v241
        %v262 = vadd.f32 %v254, %v238
        %v263 = vadd.f32 %v255, %v239
        %v264 = vadd.f32 %v256, %v240
        %v265 = vadd.f32 %v257, %v241
        %v266 = vld [vmem:[#allocation2] sm:$0xff]
        %v267 = vadd.f32 %v258, %v259
        %v268 = vadd.f32 %v267, %v260
        %v269 = vadd.f32 %v268, %v261
        %v270 = vadd.f32 %v266, %v269
        %271 = vst [vmem:[#allocation2] sm:$0xff] %v270
        %v272 = vld [vmem:[#allocation3] sm:$0xff]
        %v273 = vadd.f32 %v262, %v263
        %v274 = vadd.f32 %v273, %v264
        %v275 = vadd.f32 %v274, %v265
        %v276 = vadd.f32 %v272, %v275
        %277 = vst [vmem:[#allocation3] sm:$0xff] %v276
        // Predicated region
        $region41: #{tpu_custom_call.1} parent=27 // pred_check
          %p278 = pneg %p219
        $region42: #{tpu_custom_call.1} parent=27 // pred_check_branch
          %280 = sbr.rel (%p278) target = $region44
        $region43: #{tpu_custom_call.1} parent=27 // pred_region
          %v281 = vld [vmem:[#allocation2] sm:$0xff]
          %282 = vadd.xlane.f32.xlu0 %v281
          %v283 = vpop.xlane.xlu0 %282
          %v284 = vrot.slane %v283, 4
          %v285 = vadd.f32 %v283, %v284
          %v286 = vrot.slane %v285, 2
          %v287 = vadd.f32 %v285, %v286
          %v288 = vrot.slane %v287, 1
          %v289 = vadd.f32 %v287, %v288
          %s290 = vtos %v289
          %v291 = vld [vmem:[#allocation3] sm:$0xff]
          %292 = vadd.xlane.f32.xlu0 %v291
          %v293 = vpop.xlane.xlu0 %292
          %v294 = vrot.slane %v293, 4
          %v295 = vadd.f32 %v293, %v294
          %v296 = vrot.slane %v295, 2
          %v297 = vadd.f32 %v295, %v296
          %v298 = vrot.slane %v297, 1
          %v299 = vadd.f32 %v297, %v298
          %s300 = vtos %v299
          %s301 = sadd.f32 %s290, 1.0
          %s302 = smul.f32 %s301, 2.0
          %s303 = sadd.f32 %s300, 1.0
          %v304 = vstv %s303
          %v305 = vrcp.pop %v304
          %s306 = vtos %v305
          %s307 = smul.f32 %s302, %s306
          %v308 = vstv %s307
          %309 = vst [vmem:[%s217] sm:$0xff] %v308
        $region44: #{tpu_custom_call.1} parent=27 // pred_fallthru
          _
        %s310 = sand.u32 %s98, 1
        %s311 = scalar_lea.sflag [#allocation6], %s310
        %s312 = sand.u32 %s98, 1
        %s313 = smul.addr %s312, 8
        %s314 = scalar_lea.vmem [#allocation9], %s313
        // Predicated region
        $region45: #{tpu_custom_call.1} parent=27 // pred_check
          %p315 = pneg %p108
        $region46: #{tpu_custom_call.1} parent=27 // pred_check_branch
          %317 = sbr.rel (%p315) target = $region48
        $region47: #{tpu_custom_call.1} parent=27 // pred_region
          %s319 = ssub.s32 128, 128
          %320 = vsyncadd %s311, %s319
          %s321 = smul.addr %s26, 128
          %s322 = scalar_lea.hbm %s2, %s321
          %s324 = sshll.u32 %s314, 4
          %s325 = int_to_ptr.vmem [resolvable:$true] %s324
          %327 = dma.vmem_to_hbm [thread:$0]  %s325, 128, %s322, %s311
        $region48: #{tpu_custom_call.1} parent=27 // pred_fallthru
          _
      $region28: #{tpu_custom_call.1} parent=5 // pred_fallthru
        _
      %p328 = scmp.le.s32.totalorder 2, %s17
      // Predicated region
      $region49: #{tpu_custom_call.1} parent=5 // pred_check
        %p329 = pneg %p328
      $region50: #{tpu_custom_call.1} parent=5 // pred_check_branch
        %331 = sbr.rel (%p329) target = $region52
      $region51: #{tpu_custom_call.1} parent=5 // pred_region
        %s332 = ssub.s32 %s17, 2
        // Predicated region
        $region53: #{tpu_custom_call.1} parent=51 // pred_check
          %p333 = pneg %p114
        $region54: #{tpu_custom_call.1} parent=51 // pred_check_branch
          %335 = sbr.rel (%p333) target = $region56
        $region55: #{tpu_custom_call.1} parent=51 // pred_region
          %s336 = sand.u32 %s99, 1
          %s337 = scalar_lea.sflag [#allocation6], %s336
          %s338 = sand.u32 %s99, 1
          %s339 = smul.addr %s338, 8
          %s340 = scalar_lea.vmem [#allocation9], %s339
          %341 = dma.done %s337, 128
        $region56: #{tpu_custom_call.1} parent=51 // pred_fallthru
          _
      $region52: #{tpu_custom_call.1} parent=5 // pred_fallthru
        _
    $region6: #{tpu_custom_call.1} parent=1 // loop_footer
      %s21 = sadd.s32 1, %s17
    $region7: #{tpu_custom_call.1} parent=1 // loop_footer_branch
      %16 = sbr.rel target = $region3
    $region8: #{tpu_custom_call.1} parent=1 // loop_exit
      _
    %342 = vsyncpa [#allocation5], 1
    %s343 = scalar_lea.sflag [#allocation5], 1
    %344 = vsyncpa %s343, 1
    %345 = vsyncpa [#allocation8], 1
    %s346 = scalar_lea.sflag [#allocation8], 1
    %347 = vsyncpa %s346, 1
    %348 = vsyncpa [#allocation6], 1
    %s349 = scalar_lea.sflag [#allocation6], 1
    %350 = vsyncpa %s349, 1

</llo_original>
